<compile_context>
chip_gen: v7x
topology: tpu7x:2x2x1
jax: 0.10.0
libtpu: 0.0.40
codegen_flags: <defaults>
</compile_context>

<pallas_src>
import jax
import jax.numpy as jnp
from jax.experimental import pallas as pl
from jax.experimental.pallas import tpu as pltpu


def _round_up(x, m):
    return (x + m - 1) // m * m


def _pick_row_tile(rows, cols, itemsize=4, resident_tiles=2):
    """Row tile for lane-dense (rows, cols) kernels.

    Keeps double-buffered resident VMEM under ~6 MiB (safe under the default
    scoped VMEM limit on v5e/v6e/v7x) and keeps >= 2 grid steps when possible
    so the parallel row axis can be sharded across v7x's two TensorCores.
    """
    vmem_budget = 6 * 1024 * 1024
    per_row_bytes = max(1, 2 * resident_tiles * cols * itemsize)  # x2 for double-buffering
    tm = max(8, min(rows, 1024, vmem_budget // per_row_bytes))
    if rows > 8 and tm * 2 > rows:
        tm = -(-rows // 2)  # keep at least 2 grid steps (v7x megacore)
    tm = _round_up(tm, 8)
    return min(tm, _round_up(rows, 8))


# ----------------------------- Pallas kernels -----------------------------

def _rowmean_kernel(x_ref, o_ref):
    # AdaptiveAvgPool2d((1,1)) over a (tm, H*W) tile: mean over lanes per row.
    o_ref[...] = jnp.mean(x_ref[...].astype(jnp.float32), axis=-1, keepdims=True)


def _se_kernel(p_ref, w1_ref, b1_ref, w2_ref, b2_ref, g_ref):
    # Fused squeeze-excite: relu(conv1) -> sigmoid([conv_a2l | conv_a2g]).
    y = jnp.dot(p_ref[...], w1_ref[...], preferred_element_type=jnp.float32) + b1_ref[...]
    y = jnp.maximum(y, 0.0)
    z = jnp.dot(y, w2_ref[...], preferred_element_type=jnp.float32) + b2_ref[...]
    g_ref[...] = 1.0 / (1.0 + jnp.exp(-z))


def _scale_rows_kernel(x_ref, g_ref, o_ref):
    # Gate each row (one (n, c) channel) by its sigmoid gate, broadcast over lanes.
    o_ref[...] = (x_ref[...].astype(jnp.float32) * g_ref[...]).astype(o_ref.dtype)


# ------------------------------ kernel wrappers ------------------------------

def _pool_rows(x2d, tm):
    rows, hw = x2d.shape
    return pl.pallas_call(
        _rowmean_kernel,
        out_shape=jax.ShapeDtypeStruct((rows, 1), jnp.float32),
        grid_spec=pltpu.PrefetchScalarGridSpec(
            num_scalar_prefetch=0,
            grid=(pl.cdiv(rows, tm),),
            in_specs=[pl.BlockSpec((tm, hw), lambda i: (i, 0))],
            out_specs=pl.BlockSpec((tm, 1), lambda i: (i, 0)),
        ),
        compiler_params=pltpu.CompilerParams(dimension_semantics=("parallel",)),
    )(x2d)


def _squeeze_excite(pooled, w1, b1, w2, b2):
    n = pooled.shape[0]
    return pl.pallas_call(
        _se_kernel,
        out_shape=jax.ShapeDtypeStruct((n, w2.shape[1]), jnp.float32),
    )(pooled, w1, b1, w2, b2)


def _gate_rows(x2d, g_col, tm):
    rows, hw = x2d.shape
    return pl.pallas_call(
        _scale_rows_kernel,
        out_shape=jax.ShapeDtypeStruct((rows, hw), x2d.dtype),
        grid_spec=pltpu.PrefetchScalarGridSpec(
            num_scalar_prefetch=0,
            grid=(pl.cdiv(rows, tm),),
            in_specs=[
                pl.BlockSpec((tm, hw), lambda i: (i, 0)),
                pl.BlockSpec((tm, 1), lambda i: (i, 0)),
            ],
            out_specs=pl.BlockSpec((tm, hw), lambda i: (i, 0)),
        ),
        compiler_params=pltpu.CompilerParams(dimension_semantics=("parallel",)),
    )(x2d, g_col)


# ------------------------------ forward pass ------------------------------

def ffcse_forward(params, id_l, id_g=None):
    """FFCSE_block.forward for (id_l, id_g); id_g=None mirrors PyTorch's `id_g == 0` path."""
    w1, b1, w2, b2 = params["w1"], params["b1"], params["w2"], params["b2"]
    n, in_cl, h, w = id_l.shape
    hw = h * w
    in_cg = w2.shape[1] - in_cl
    has_g = id_g is not None

    # 1) adaptive average pool to (1,1): per-(n, c) mean over H*W (lane-dense rows).
    l2d = id_l.reshape(n * in_cl, hw)
    tm_l = _pick_row_tile(n * in_cl, hw, jnp.dtype(id_l.dtype).itemsize, resident_tiles=2)
    pooled_l = _pool_rows(l2d, tm_l).reshape(n, in_cl)
    if has_g:
        g2d = id_g.reshape(n * in_cg, hw)
        tm_g = _pick_row_tile(n * in_cg, hw, jnp.dtype(id_g.dtype).itemsize, resident_tiles=2)
        pooled_g = _pool_rows(g2d, tm_g).reshape(n, in_cg)
        pooled = jnp.concatenate([pooled_l, pooled_g], axis=1)  # = pool(cat([id_l,id_g],C))
    else:
        pooled = pooled_l

    # 2) squeeze-excite: relu(conv1(x)) then sigmoid(conv_a2l / conv_a2g), fused.
    gates = _squeeze_excite(pooled, w1, b1, w2, b2)
    gate_l = gates[:, :in_cl]
    gate_g = gates[:, in_cl:]

    # 3) gate the identity branches (lane-dense broadcast multiply).
    x_l = (
        _gate_rows(l2d, gate_l.reshape(n * in_cl, 1), tm_l).reshape(n, in_cl, h, w)
        if in_cl > 0 else 0
    )
    if in_cg > 0:
        if has_g:
            x_g = _gate_rows(g2d, gate_g.reshape(n * in_cg, 1), tm_g).reshape(n, in_cg, h, w)
        else:
            # PyTorch: id_g is the int 0 -> 0 * sigmoid(conv_a2g(x)) == zeros (n, in_cg, 1, 1)
            x_g = jnp.zeros((n, in_cg, 1, 1), id_l.dtype)
    else:
        x_g = 0
    # TODO(synk): degenerate ratio_g in {0, 1} (a missing branch) follows the same
    # python-level `0` convention as PyTorch and is not exercised here.
    return x_l, x_g


# ------------------------------ params & reference ------------------------------

def init_params(key, channels, ratio_g, r=16):
    """Conv2d(k=1) weights stored transposed as (in, out) for `x @ W`; a2l/a2g columns
    are concatenated as [local | global] so one fused kernel produces all gates."""
    in_cg = int(channels * ratio_g)
    in_cl = channels - in_cg
    hidden = channels // r
    assert hidden >= 1, "channels must be >= 16 (r=16) for a valid FFCSE_block"
    k = jax.random.split(key, 4)
    return {
        "w1": 0.2 * jax.random.normal(k[0], (channels, hidden), jnp.float32),
        "b1": 0.05 * jax.random.normal(k[1], (1, hidden), jnp.float32),
        "w2": 0.2 * jax.random.normal(k[2], (hidden, in_cl + in_cg), jnp.float32),
        "b2": 0.05 * jax.random.normal(k[3], (1, in_cl + in_cg), jnp.float32),
    }


def ffcse_reference(params, id_l, id_g):
    x = jnp.concatenate([id_l, id_g], axis=1)
    pooled = x.mean(axis=(2, 3))
    y = jnp.maximum(pooled @ params["w1"] + params["b1"], 0.0)
    gates = 1.0 / (1.0 + jnp.exp(-(y @ params["w2"] + params["b2"])))
    in_cl = id_l.shape[1]
    gl = gates[:, :in_cl][:, :, None, None]
    gg = gates[:, in_cl:][:, :, None, None]
    return id_l * gl, id_g * gg


if __name__ == "__main__":
    key = jax.random.PRNGKey(0)
    k_l, k_g, k_p = jax.random.split(key, 3)

    N, H, W = 2, 16, 16
    channels, ratio_g = 64, 0.5          # r=16 -> hidden=4, in_cl=in_cg=32
    in_cg = int(channels * ratio_g)
    in_cl = channels - in_cg

    id_l = jax.random.normal(k_l, (N, in_cl, H, W), jnp.float32)
    id_g = jax.random.normal(k_g, (N, in_cg, H, W), jnp.float32)
    params = init_params(k_p, channels, ratio_g)

    fwd = jax.jit(ffcse_forward)
    x_l, x_g = fwd(params, id_l, id_g)
    jax.block_until_ready((x_l, x_g))

    assert x_l.shape == (N, in_cl, H, W), x_l.shape
    assert x_g.shape == (N, in_cg, H, W), x_g.shape
    assert jnp.isfinite(x_l).all() and jnp.isfinite(x_g).all()

    ref_l, ref_g = ffcse_reference(params, id_l, id_g)
    assert jnp.allclose(x_l, ref_l, rtol=1e-4, atol=1e-4)
    assert jnp.allclose(x_g, ref_g, rtol=1e-4, atol=1e-4)
    print("KERNEL_OK")
</pallas_src>

<mosaic_0001>
module attributes {stable_mosaic.version = 11 : i64} {
  func.func @_rowmean_kernel(%arg0: i32, %arg1: memref<32x256xf32, #tpu.memory_space<vmem>>, %arg2: memref<32x1xf32, #tpu.memory_space<vmem>>) attributes {dimension_semantics = [#tpu.dimension_semantics<parallel>], iteration_bounds = array<i64: 2>, scalar_prefetch = 0 : i64, scratch_operands = 0 : i64, tpu.core_type = #tpu.core_type<tc>, window_params = [{transform_indices = @transform_0, window_bounds = array<i64: 32, 256>}, {transform_indices = @transform_1, window_bounds = array<i64: 32, 1>}]} {
    %c0 = arith.constant 0 : index
    %c0_0 = arith.constant 0 : index
    %0 = vector.load %arg1[%c0, %c0_0] : memref<32x256xf32, #tpu.memory_space<vmem>>, vector<32x256xf32>
    %cst = arith.constant dense<0.000000e+00> : vector<32xf32>
    %1 = vector.multi_reduction <add>, %0, %cst [1] : vector<32x256xf32> to vector<32xf32>
    %2 = vector.shape_cast %1 : vector<32xf32> to vector<32x1xf32>
    %cst_1 = arith.constant 2.560000e+02 : f32
    %3 = vector.broadcast %cst_1 : f32 to vector<32x1xf32>
    %4 = arith.divf %2, %3 : vector<32x1xf32>
    %c0_2 = arith.constant 0 : index
    %c0_3 = arith.constant 0 : index
    %5 = vector.load %arg2[%c0_2, %c0_3] : memref<32x1xf32, #tpu.memory_space<vmem>>, vector<32x1xf32>
    tpu.vector_store %arg2[%c0_2, %c0_3], %4 {strides = array<i32>} : memref<32x1xf32, #tpu.memory_space<vmem>>, vector<32x1xf32>,
    return
  }
  func.func @transform_0(%arg0: i32) -> (i32, i32) {
    %c0_i32 = arith.constant 0 : i32
    %c0_i32_0 = arith.constant 0 : i32
    return %arg0, %c0_i32 : i32, i32
  }
  func.func @transform_1(%arg0: i32) -> (i32, i32) {
    %c0_i32 = arith.constant 0 : i32
    %c0_i32_0 = arith.constant 0 : i32
    return %arg0, %c0_i32 : i32, i32
  }
}

module attributes {stable_mosaic.version = 11 : i64} {
  func.func @_se_kernel(%arg0: memref<2x64xf32, #tpu.memory_space<vmem>>, %arg1: memref<64x4xf32, #tpu.memory_space<vmem>>, %arg2: memref<1x4xf32, #tpu.memory_space<vmem>>, %arg3: memref<4x64xf32, #tpu.memory_space<vmem>>, %arg4: memref<1x64xf32, #tpu.memory_space<vmem>>, %arg5: memref<2x64xf32, #tpu.memory_space<vmem>>) attributes {dimension_semantics = [], scalar_prefetch = 0 : i64, scratch_operands = 0 : i64, tpu.core_type = #tpu.core_type<tc>} {
    %c0 = arith.constant 0 : index
    %c0_0 = arith.constant 0 : index
    %0 = vector.load %arg0[%c0, %c0_0] : memref<2x64xf32, #tpu.memory_space<vmem>>, vector<2x64xf32>
    %c0_1 = arith.constant 0 : index
    %c0_2 = arith.constant 0 : index
    %1 = vector.load %arg1[%c0_1, %c0_2] : memref<64x4xf32, #tpu.memory_space<vmem>>, vector<64x4xf32>
    %cst = arith.constant dense<0.000000e+00> : vector<2x4xf32>
    %2 = tpu.matmul %0, %1, %cst {dimension_numbers = #tpu.dot_dimension_numbers<[1], [0], [0], [1], [0, 0, 1, 1], [], []>} : vector<2x64xf32>, vector<64x4xf32>, vector<2x4xf32> -> vector<2x4xf32>
    %c0_3 = arith.constant 0 : index
    %c0_4 = arith.constant 0 : index
    %3 = vector.load %arg2[%c0_3, %c0_4] : memref<1x4xf32, #tpu.memory_space<vmem>>, vector<1x4xf32>
    %4 = vector.broadcast %3 : vector<1x4xf32> to vector<2x4xf32>
    %5 = arith.addf %2, %4 : vector<2x4xf32>
    %cst_5 = arith.constant 0.000000e+00 : f32
    %6 = vector.broadcast %cst_5 : f32 to vector<2x4xf32>
    %7 = arith.maximumf %5, %6 : vector<2x4xf32>
    %c0_6 = arith.constant 0 : index
    %c0_7 = arith.constant 0 : index
    %8 = vector.load %arg3[%c0_6, %c0_7] : memref<4x64xf32, #tpu.memory_space<vmem>>, vector<4x64xf32>
    %cst_8 = arith.constant dense<0.000000e+00> : vector<2x64xf32>
    %9 = tpu.matmul %7, %8, %cst_8 {dimension_numbers = #tpu.dot_dimension_numbers<[1], [0], [0], [1], [0, 0, 1, 1], [], []>} : vector<2x4xf32>, vector<4x64xf32>, vector<2x64xf32> -> vector<2x64xf32>
    %c0_9 = arith.constant 0 : index
    %c0_10 = arith.constant 0 : index
    %10 = vector.load %arg4[%c0_9, %c0_10] : memref<1x64xf32, #tpu.memory_space<vmem>>, vector<1x64xf32>
    %11 = vector.broadcast %10 : vector<1x64xf32> to vector<2x64xf32>
    %12 = arith.addf %9, %11 : vector<2x64xf32>
    %cst_11 = arith.constant 0.000000e+00 : f32
    %13 = vector.broadcast %cst_11 : f32 to vector<2x64xf32>
    %14 = arith.subf %13, %12 : vector<2x64xf32>
    %15 = math.exp %14 : vector<2x64xf32>
    %cst_12 = arith.constant 1.000000e+00 : f32
    %16 = vector.broadcast %cst_12 : f32 to vector<2x64xf32>
    %17 = arith.addf %16, %15 : vector<2x64xf32>
    %cst_13 = arith.constant 1.000000e+00 : f32
    %18 = vector.broadcast %cst_13 : f32 to vector<2x64xf32>
    %19 = arith.divf %18, %17 : vector<2x64xf32>
    %c0_14 = arith.constant 0 : index
    %c0_15 = arith.constant 0 : index
    %20 = vector.load %arg5[%c0_14, %c0_15] : memref<2x64xf32, #tpu.memory_space<vmem>>, vector<2x64xf32>
    tpu.vector_store %arg5[%c0_14, %c0_15], %19 {strides = array<i32>} : memref<2x64xf32, #tpu.memory_space<vmem>>, vector<2x64xf32>,
    return
  }
}

module attributes {stable_mosaic.version = 11 : i64} {
  func.func @_scale_rows_kernel(%arg0: i32, %arg1: memref<32x256xf32, #tpu.memory_space<vmem>>, %arg2: memref<32x1xf32, #tpu.memory_space<vmem>>, %arg3: memref<32x256xf32, #tpu.memory_space<vmem>>) attributes {dimension_semantics = [#tpu.dimension_semantics<parallel>], iteration_bounds = array<i64: 2>, scalar_prefetch = 0 : i64, scratch_operands = 0 : i64, tpu.core_type = #tpu.core_type<tc>, window_params = [{transform_indices = @transform_0, window_bounds = array<i64: 32, 256>}, {transform_indices = @transform_1, window_bounds = array<i64: 32, 1>}, {transform_indices = @transform_2, window_bounds = array<i64: 32, 256>}]} {
    %c0 = arith.constant 0 : index
    %c0_0 = arith.constant 0 : index
    %0 = vector.load %arg1[%c0, %c0_0] : memref<32x256xf32, #tpu.memory_space<vmem>>, vector<32x256xf32>
    %c0_1 = arith.constant 0 : index
    %c0_2 = arith.constant 0 : index
    %1 = vector.load %arg2[%c0_1, %c0_2] : memref<32x1xf32, #tpu.memory_space<vmem>>, vector<32x1xf32>
    %2 = vector.broadcast %1 : vector<32x1xf32> to vector<32x256xf32>
    %3 = arith.mulf %0, %2 : vector<32x256xf32>
    %c0_3 = arith.constant 0 : index
    %c0_4 = arith.constant 0 : index
    %4 = vector.load %arg3[%c0_3, %c0_4] : memref<32x256xf32, #tpu.memory_space<vmem>>, vector<32x256xf32>
    tpu.vector_store %arg3[%c0_3, %c0_4], %3 {strides = array<i32>} : memref<32x256xf32, #tpu.memory_space<vmem>>, vector<32x256xf32>,
    return
  }
  func.func @transform_0(%arg0: i32) -> (i32, i32) {
    %c0_i32 = arith.constant 0 : i32
    %c0_i32_0 = arith.constant 0 : i32
    return %arg0, %c0_i32 : i32, i32
  }
  func.func @transform_1(%arg0: i32) -> (i32, i32) {
    %c0_i32 = arith.constant 0 : i32
    %c0_i32_0 = arith.constant 0 : i32
    return %arg0, %c0_i32 : i32, i32
  }
  func.func @transform_2(%arg0: i32) -> (i32, i32) {
    %c0_i32 = arith.constant 0 : i32
    %c0_i32_0 = arith.constant 0 : i32
    return %arg0, %c0_i32 : i32, i32
  }
}

</mosaic_0001>

<llo_original>
// kernel: ffcse_forward.5
$region0: #{ffcse_forward.5}
  #allocation0 [shape = 'u32[]', space=smem, size = 0x4, offset = 0x4, fixed_abs, tag = 'smem constant byte address 0x4 - core index']
  #allocation1 [shape = 'u32[144,128]{1,0:T(1,128)}', space=vmem, size = 0x12000, scoped, tag = 'internal scratch']
  %s0 = inlined_call_operand.vmem [shape: f32[64,256], index: 0, kind: input, shape index: {}]
  %s1 = inlined_call_operand.vmem [shape: f32[64,1], index: 1, kind: output, shape index: {}]
  %s2 = sld [smem:[#allocation0]]
  $region37: #{ffcse_forward.5} parent=0
    _
  %s4 = ssub.s32 1, %s2
  %s5 = scalar_select 0, %s4, %s2
  loop: start=0, step=1, limit=4
  $region2: #{ffcse_forward.5} parent=0 // loop_pre_header
    _
  $region3: #{ffcse_forward.5} parent=0 // loop_header
    %s7 = sphi 0, %s11
    %p8 = scmp.ge.s32.totalorder %s7, 4
    %s17 = sphi 0, %s19
    %s20 = sphi 0, %s17
    %s21 = sphi 0, %s20
    %s37 = sphi 0, %s21
    %s43 = sphi 0, %s45
    %s46 = sphi 0, %s43
    %s47 = sphi 0, %s46
    %s63 = sphi 0, %s47
  $region4: #{ffcse_forward.5} parent=0 // loop_header_branch
    %10 = sbr.rel (%p8) target = $region8
  $region5: #{ffcse_forward.5} parent=0 // loop_body
    %s12 = ssub.s32 %s7, 1
    %s13 = ssub.s32 %s7, 2
    %s14 = sadd.s32 %s7, 1
    %s15 = ssub.s32 %s7, %s14
    %p16 = scmp.eq.s32.totalorder %s15, 0
    %s18 = sadd.s32 %s17, 1
    %s19 = scalar_select %p16, %s17, %s18
    %p22 = pneg %p16
    %p23 = scmp.eq.s32.totalorder %s7, 1
    %p24 = por %p22, %p23
    %p25 = scmp.ne.s32.totalorder %s17, %s20
    %p26 = scmp.eq.s32.totalorder %s7, 0
    %p27 = por %p25, %p26
    %p28 = scmp.ne.s32.totalorder %s17, %s20
    %p29 = scmp.eq.s32.totalorder %s12, 1
    %p30 = por %p28, %p29
    %p31 = scmp.ne.s32.totalorder %s20, %s21
    %p32 = scmp.eq.s32.totalorder %s12, 0
    %p33 = por %p31, %p32
    %p34 = scmp.ne.s32.totalorder %s20, %s21
    %p35 = scmp.eq.s32.totalorder %s13, 1
    %p36 = por %p34, %p35
    %p38 = scmp.ne.s32.totalorder %s21, %s37
    %p39 = scmp.eq.s32.totalorder %s13, 0
    %p40 = por %p38, %p39
    %s41 = ssub.s32 %s7, %s14
    %p42 = scmp.eq.s32.totalorder %s41, 0
    %s44 = sadd.s32 %s43, 1
    %s45 = scalar_select %p42, %s43, %s44
    %p48 = pneg %p42
    %p49 = scmp.eq.s32.totalorder %s7, 1
    %p50 = por %p48, %p49
    %p51 = scmp.ne.s32.totalorder %s43, %s46
    %p52 = scmp.eq.s32.totalorder %s7, 0
    %p53 = por %p51, %p52
    %p54 = scmp.ne.s32.totalorder %s43, %s46
    %p55 = scmp.eq.s32.totalorder %s12, 1
    %p56 = por %p54, %p55
    %p57 = scmp.ne.s32.totalorder %s46, %s47
    %p58 = scmp.eq.s32.totalorder %s12, 0
    %p59 = por %p57, %p58
    %p60 = scmp.ne.s32.totalorder %s46, %s47
    %p61 = scmp.eq.s32.totalorder %s13, 1
    %p62 = por %p60, %p61
    %p64 = scmp.ne.s32.totalorder %s47, %s63
    %p65 = scmp.eq.s32.totalorder %s13, 0
    %p66 = por %p64, %p65
    %p67 = scmp.le.s32.totalorder 1, %s7
    %p68 = scmp.lt.s32.totalorder %s7, 3
    %p69 = pnand %p67, %p68
    %p70 = pneg %p69
    // Predicated region
    $region9: #{ffcse_forward.5} parent=5 // pred_check
      _
    $region10: #{ffcse_forward.5} parent=5 // pred_check_branch
      %72 = sbr.rel (%p69) target = $region12
    $region11: #{ffcse_forward.5} parent=5 // pred_region
      %s73 = ssub.s32 %s7, 1
    $region12: #{ffcse_forward.5} parent=5 // pred_fallthru
      _
    %p74 = scmp.lt.s32.totalorder %s7, 2
    // Predicated region
    $region13: #{ffcse_forward.5} parent=5 // pred_check
      %p75 = pneg %p74
    $region14: #{ffcse_forward.5} parent=5 // pred_check_branch
      %77 = sbr.rel (%p75) target = $region16
    $region15: #{ffcse_forward.5} parent=5 // pred_region
      // Predicated region
      $region17: #{ffcse_forward.5} parent=15 // pred_check
        %p78 = pneg %p27
      $region18: #{ffcse_forward.5} parent=15 // pred_check_branch
        %80 = sbr.rel (%p78) target = $region20
      $region19: #{ffcse_forward.5} parent=15 // pred_region
        %s81 = smul.u32 4, %s7
        %p82 = scmp.lt.s32.totalorder %s81, 7
        %s83 = scalar_select %p82, %s81, 7
        %s84 = smul.addr %s83, 2
        %s85 = smul.addr %s84, 8
        %s86 = scalar_lea.vmem %s0, %s85
        %s87 = smul.u32 4, %s7
      $region20: #{ffcse_forward.5} parent=15 // pred_fallthru
        _
    $region16: #{ffcse_forward.5} parent=5 // pred_fallthru
      _
    %p88 = scmp.le.s32.totalorder 1, %s7
    %p89 = scmp.lt.s32.totalorder %s7, 3
    %p90 = pnand %p88, %p89
    %p91 = pneg %p90
    // Predicated region
    $region21: #{ffcse_forward.5} parent=5 // pred_check
      _
    $region22: #{ffcse_forward.5} parent=5 // pred_check_branch
      %93 = sbr.rel (%p90) target = $region24
    $region23: #{ffcse_forward.5} parent=5 // pred_region
      %s94 = ssub.s32 %s7, 1
      %s95 = smul.u32 4, %s12
      %p96 = scmp.lt.s32.totalorder %s95, 7
      %s97 = scalar_select %p96, %s95, 7
      %s98 = smul.addr %s97, 2
      %s99 = smul.addr %s98, 8
      %s100 = scalar_lea.vmem %s0, %s99
      %p101 = pneg %p33
      %p102 = pneg %p30
      %p103 = pneg %p59
      %p104 = pneg %p56
      %s105 = smul.u32 4, %s12
      %p106 = scmp.lt.s32.totalorder %s105, 7
      %s107 = scalar_select %p106, %s105, 7
      %s108 = smul.addr %s107, 8
      %s109 = scalar_lea.vmem %s1, %s108
      %s110 = smul.u32 4, %s12
      %p111 = scmp.lt.s32.totalorder %s110, 7
      %s112 = scalar_select %p111, %s110, 7
      %s113 = smul.addr %s112, 2
      %s114 = smul.addr %s113, 8
      %s115 = scalar_lea.vmem %s0, %s114
      %s116 = smul.u32 4, %s12
      %s117 = smul.u32 4, %s12
      %p118 = scmp.lt.s32.totalorder %s117, 7
      %s119 = scalar_select %p118, %s117, 7
      %s120 = smul.addr %s119, 8
      %s121 = scalar_lea.vmem %s1, %s120
      %s122 = smul.u32 4, %s12
      %v123 = vld [vmem:[%s115] sm:$0xff]
      %v124 = vld [vmem:[%s115 + $0x8] sm:$0xff]
      %v125 = vld [vmem:[%s115 + $0x10] sm:$0xff]
      %v126 = vld [vmem:[%s115 + $0x18] sm:$0xff]
      %v127 = vld [vmem:[%s115 + $0x20] sm:$0xff]
      %v128 = vld [vmem:[%s115 + $0x28] sm:$0xff]
      %v129 = vld [vmem:[%s115 + $0x30] sm:$0xff]
      %v130 = vld [vmem:[%s115 + $0x38] sm:$0xff]
      %v131 = vadd.f32 %v123, %v124
      %132 = vadd.xlane.f32.xlu0 %v131
      %v133 = vpop.xlane.xlu0 %132
      %v134 = vadd.f32 %v125, %v126
      %135 = vadd.xlane.f32.xlu0 %v134
      %v136 = vpop.xlane.xlu0 %135
      %v137 = vadd.f32 %v127, %v128
      %138 = vadd.xlane.f32.xlu0 %v137
      %v139 = vpop.xlane.xlu0 %138
      %v140 = vadd.f32 %v129, %v130
      %141 = vadd.xlane.f32.xlu0 %v140
      %v142 = vpop.xlane.xlu0 %141
      %v143 = vrcp.pop 256.0
      %v144 = vmul.f32 %v133, %v143
      %v145 = vmul.f32 %v136, %v143
      %v146 = vmul.f32 %v139, %v143
      %v147 = vmul.f32 %v142, %v143
      %vm148 = vcmask 7168
      %149 = vst.msk [vmem:[%s121] sm:$0xff] %vm148, %v144
      %150 = vst.msk [vmem:[%s121 + $0x8] sm:$0xff] %vm148, %v145
      %151 = vst.msk [vmem:[%s121 + $0x10] sm:$0xff] %vm148, %v146
      %152 = vst.msk [vmem:[%s121 + $0x18] sm:$0xff] %vm148, %v147
      %s153 = smul.u32 4, %s12
      %p154 = scmp.lt.s32.totalorder %s153, 7
      %s155 = scalar_select %p154, %s153, 7
      %s156 = smul.addr %s155, 8
      %s157 = scalar_lea.vmem %s1, %s156
      // Predicated region
      $region25: #{ffcse_forward.5} parent=23 // pred_check
        %p158 = pneg %p56
      $region26: #{ffcse_forward.5} parent=23 // pred_check_branch
        %160 = sbr.rel (%p158) target = $region28
      $region27: #{ffcse_forward.5} parent=23 // pred_region
        %s161 = smul.u32 4, %s12
      $region28: #{ffcse_forward.5} parent=23 // pred_fallthru
        _
    $region24: #{ffcse_forward.5} parent=5 // pred_fallthru
      _
    %p162 = scmp.le.s32.totalorder 2, %s7
    // Predicated region
    $region29: #{ffcse_forward.5} parent=5 // pred_check
      %p163 = pneg %p162
    $region30: #{ffcse_forward.5} parent=5 // pred_check_branch
      %165 = sbr.rel (%p163) target = $region32
    $region31: #{ffcse_forward.5} parent=5 // pred_region
      %s166 = ssub.s32 %s7, 2
      // Predicated region
      $region33: #{ffcse_forward.5} parent=31 // pred_check
        %p167 = pneg %p62
      $region34: #{ffcse_forward.5} parent=31 // pred_check_branch
        %169 = sbr.rel (%p167) target = $region36
      $region35: #{ffcse_forward.5} parent=31 // pred_region
        %s170 = smul.u32 4, %s13
        %p171 = scmp.lt.s32.totalorder %s170, 7
        %s172 = scalar_select %p171, %s170, 7
        %s173 = smul.addr %s172, 8
        %s174 = scalar_lea.vmem %s1, %s173
      $region36: #{ffcse_forward.5} parent=31 // pred_fallthru
        _
    $region32: #{ffcse_forward.5} parent=5 // pred_fallthru
      _
  $region6: #{ffcse_forward.5} parent=0 // loop_footer
    %s11 = sadd.s32 1, %s7
  $region7: #{ffcse_forward.5} parent=0 // loop_footer_branch
    %6 = sbr.rel target = $region3
  $region8: #{ffcse_forward.5} parent=0 // loop_exit
    _

// kernel: ffcse_forward.7
$region0: #{ffcse_forward.7}
  #allocation0 [shape = 'u32[]', space=smem, size = 0x4, offset = 0x4, fixed_abs, tag = 'smem constant byte address 0x4 - core index']
  #allocation1 [shape = 'u32[144,128]{1,0:T(1,128)}', space=vmem, size = 0x12000, scoped, tag = 'internal scratch']
  %s0 = inlined_call_operand.vmem [shape: f32[2,64], index: 0, kind: input, shape index: {}]
  %s1 = inlined_call_operand.vmem [shape: f32[64,4], index: 1, kind: input, shape index: {}]
  %s2 = inlined_call_operand.vmem [shape: f32[1,4], index: 2, kind: input, shape index: {}]
  %s3 = inlined_call_operand.vmem [shape: f32[4,64], index: 3, kind: input, shape index: {}]
  %s4 = inlined_call_operand.vmem [shape: f32[1,64], index: 4, kind: input, shape index: {}]
  %s5 = inlined_call_operand.vmem [shape: f32[2,64], index: 5, kind: output, shape index: {}]
  %s6 = sld [smem:[#allocation0]]
  $region30: #{ffcse_forward.7} parent=0
    _
  %s8 = ssub.s32 1, %s6
  %s9 = scalar_select 0, %s8, %s6
  // Predicated region
  $region2: #{ffcse_forward.7} parent=0 // pred_check
    _
  $region3: #{ffcse_forward.7} parent=0 // pred_check_branch
    %11 = sbr.rel (0) target = $region5
  $region4: #{ffcse_forward.7} parent=0 // pred_region
    _
  $region5: #{ffcse_forward.7} parent=0 // pred_fallthru
    _
  // Predicated region
  $region6: #{ffcse_forward.7} parent=0 // pred_check
    _
  $region7: #{ffcse_forward.7} parent=0 // pred_check_branch
    %13 = sbr.rel (0) target = $region9
  $region8: #{ffcse_forward.7} parent=0 // pred_region
    _
  $region9: #{ffcse_forward.7} parent=0 // pred_fallthru
    _
  // Predicated region
  $region10: #{ffcse_forward.7} parent=0 // pred_check
    _
  $region11: #{ffcse_forward.7} parent=0 // pred_check_branch
    %15 = sbr.rel (0) target = $region13
  $region12: #{ffcse_forward.7} parent=0 // pred_region
    _
  $region13: #{ffcse_forward.7} parent=0 // pred_fallthru
    _
  // Predicated region
  $region14: #{ffcse_forward.7} parent=0 // pred_check
    _
  $region15: #{ffcse_forward.7} parent=0 // pred_check_branch
    %17 = sbr.rel (0) target = $region17
  $region16: #{ffcse_forward.7} parent=0 // pred_region
    _
  $region17: #{ffcse_forward.7} parent=0 // pred_fallthru
    _
  // Predicated region
  $region18: #{ffcse_forward.7} parent=0 // pred_check
    _
  $region19: #{ffcse_forward.7} parent=0 // pred_check_branch
    %19 = sbr.rel (0) target = $region21
  $region20: #{ffcse_forward.7} parent=0 // pred_region
    _
  $region21: #{ffcse_forward.7} parent=0 // pred_fallthru
    _
  %v20 = vld [vmem:[%s0] sm:$0x3]
  %v21 = vld [vmem:[%s1] sm:$0xff]
  %v22 = vld [vmem:[%s1 + $0x8] sm:$0xff]
  %v23 = vld [vmem:[%s1 + $0x10] sm:$0xff]
  %v24 = vld [vmem:[%s1 + $0x18] sm:$0xff]
  %v25 = vld [vmem:[%s1 + $0x20] sm:$0xff]
  %v26 = vld [vmem:[%s1 + $0x28] sm:$0xff]
  %v27 = vld [vmem:[%s1 + $0x30] sm:$0xff]
  %v28 = vld [vmem:[%s1 + $0x38] sm:$0xff]
  %v29 = vld [vmem:[%s2] sm:$0x1]
  %v31 = vlaneseq
  %v32 = vshrl.u32 %v31, 7
  %v33 = vsub.s32 0, %v32
  %v34 = vrot.slane %v29, %v33
  %vm36 = vcmask 523264
  %v38 = vsel %vm36, %v20, 0
  %40 = vmatprep.subr.mxu0 0.0
  %41 = vmatpush1.msra.mxu0 %v21
  %42 = vmatprep.subr.mxu0 0.0
  %43 = vmatpush1.msra.mxu0 %v22
  %44 = vmatprep.subr.mxu0 0.0
  %45 = vmatpush1.msra.mxu0 %v23
  %46 = vmatprep.subr.mxu0 0.0
  %47 = vmatpush1.msra.mxu0 %v24
  %48 = vmatprep.subr.mxu0 0.0
  %49 = vmatpush1.msra.mxu0 %v25
  %50 = vmatprep.subr.mxu0 0.0
  %51 = vmatpush1.msra.mxu0 %v26
  %52 = vmatprep.subr.mxu0 0.0
  %53 = vmatpush1.msra.mxu0 %v27
  %54 = vmatprep.subr.mxu0 0.0
  %55 = vmatpush1.msra.mxu0 %v28
  %56 = vmatprep.subr.mxu0 0.0
  %57 = vmatpush1.msra.mxu0 0.0
  %58 = vmatprep.subr.mxu0 0.0
  %59 = vmatpush1.msra.mxu0 0.0
  %60 = vmatprep.subr.mxu0 0.0
  %61 = vmatpush1.msra.mxu0 0.0
  %62 = vmatprep.subr.mxu0 0.0
  %63 = vmatpush1.msra.mxu0 0.0
  %64 = vmatprep.subr.mxu0 0.0
  %65 = vmatpush1.msra.mxu0 0.0
  %66 = vmatprep.subr.mxu0 0.0
  %67 = vmatpush1.msra.mxu0 0.0
  %68 = vmatprep.subr.mxu0 0.0
  %69 = vmatpush1.msra.mxu0 0.0
  %70 = vmatprep.subr.mxu0 0.0
  %71 = vmatpush1.msra.mxu0 0.0
  %72 = vmatprep.subr.mxu0 0.0
  %73 = vmatpush1.msra.mxu0 0.0
  %74 = vmatprep.subr.mxu0 0.0
  %75 = vmatpush1.msra.mxu0 0.0
  %76 = vmatprep.subr.mxu0 0.0
  %77 = vmatpush1.msra.mxu0 0.0
  %78 = vmatprep.subr.mxu0 0.0
  %79 = vmatpush1.msra.mxu0 0.0
  %80 = vmatprep.subr.mxu0 0.0
  %81 = vmatpush1.msra.mxu0 0.0
  %82 = vmatprep.subr.mxu0 0.0
  %83 = vmatpush1.msra.mxu0 0.0
  %84 = vmatprep.subr.mxu0 0.0
  %85 = vmatpush1.msra.mxu0 0.0
  %86 = vmatprep.subr.mxu0 0.0
  %87 = vmatpush1.msra.mxu0 0.0
  %88 = vmatprep.subr.mxu0 0.0
  %89 = vmatpush1.msra.mxu0 0.0
  %90 = vmatprep.subr.mxu0 0.0
  %91 = vmatpush1.msra.mxu0 0.0
  %92 = vmatprep.subr.mxu0 0.0
  %93 = vmatpush1.msra.mxu0 0.0
  %94 = vmatprep.subr.mxu0 0.0
  %95 = vmatpush1.msra.mxu0 0.0
  %96 = vmatprep.subr.mxu0 0.0
  %97 = vmatpush1.msra.mxu0 0.0
  %98 = vmatprep.subr.mxu0 0.0
  %99 = vmatpush1.msra.mxu0 0.0
  %100 = vmatprep.subr.mxu0 0.0
  %101 = vmatpush1.msra.mxu0 0.0
  %102 = vmatprep.subr.mxu0 0.0
  %103 = vmatpush1.msra.mxu0 0.0
  %104 = vmatprep.mubr.f32.mxu0 0.0
  %105 = vmatmul.mubr.f32.gmra.mrb[0].mxu0 %v38
  %v106 = vpop.f32.mrb[0].mxu0
  %v107 = vadd.f32 %v34, %v106
  %v108 = vpop.f32.mrb[0].mxu0
  %109 = vdwg.mxu0
  %v110 = vmax.f32 %v107, 0.0
  %v111 = vld [vmem:[%s3] sm:$0xf]
  %v112 = vld [vmem:[%s4] sm:$0x1]
  %v114 = vlaneseq
  %v115 = vshrl.u32 %v114, 7
  %v116 = vsub.s32 0, %v115
  %v117 = vrot.slane %v112, %v116
  %vm119 = vcmask 31744
  %v121 = vsel %vm119, %v110, 0
  %vm123 = vcmask 1043456
  %v125 = vsel %vm123, %v111, 0
  %127 = vmatprep.subr.mxu0 0.0
  %128 = vmatpush1.msra.mxu0 %v125
  %129 = vmatprep.subr.mxu0 0.0
  %130 = vmatpush1.msra.mxu0 0.0
  %131 = vmatprep.subr.mxu0 0.0
  %132 = vmatpush1.msra.mxu0 0.0
  %133 = vmatprep.subr.mxu0 0.0
  %134 = vmatpush1.msra.mxu0 0.0
  %135 = vmatprep.subr.mxu0 0.0
  %136 = vmatpush1.msra.mxu0 0.0
  %137 = vmatprep.subr.mxu0 0.0
  %138 = vmatpush1.msra.mxu0 0.0
  %139 = vmatprep.subr.mxu0 0.0
  %140 = vmatpush1.msra.mxu0 0.0
  %141 = vmatprep.subr.mxu0 0.0
  %142 = vmatpush1.msra.mxu0 0.0
  %143 = vmatprep.subr.mxu0 0.0
  %144 = vmatpush1.msra.mxu0 0.0
  %145 = vmatprep.subr.mxu0 0.0
  %146 = vmatpush1.msra.mxu0 0.0
  %147 = vmatprep.subr.mxu0 0.0
  %148 = vmatpush1.msra.mxu0 0.0
  %149 = vmatprep.subr.mxu0 0.0
  %150 = vmatpush1.msra.mxu0 0.0
  %151 = vmatprep.subr.mxu0 0.0
  %152 = vmatpush1.msra.mxu0 0.0
  %153 = vmatprep.subr.mxu0 0.0
  %154 = vmatpush1.msra.mxu0 0.0
  %155 = vmatprep.subr.mxu0 0.0
  %156 = vmatpush1.msra.mxu0 0.0
  %157 = vmatprep.subr.mxu0 0.0
  %158 = vmatpush1.msra.mxu0 0.0
  %159 = vmatprep.subr.mxu0 0.0
  %160 = vmatpush1.msra.mxu0 0.0
  %161 = vmatprep.subr.mxu0 0.0
  %162 = vmatpush1.msra.mxu0 0.0
  %163 = vmatprep.subr.mxu0 0.0
  %164 = vmatpush1.msra.mxu0 0.0
  %165 = vmatprep.subr.mxu0 0.0
  %166 = vmatpush1.msra.mxu0 0.0
  %167 = vmatprep.subr.mxu0 0.0
  %168 = vmatpush1.msra.mxu0 0.0
  %169 = vmatprep.subr.mxu0 0.0
  %170 = vmatpush1.msra.mxu0 0.0
  %171 = vmatprep.subr.mxu0 0.0
  %172 = vmatpush1.msra.mxu0 0.0
  %173 = vmatprep.subr.mxu0 0.0
  %174 = vmatpush1.msra.mxu0 0.0
  %175 = vmatprep.subr.mxu0 0.0
  %176 = vmatpush1.msra.mxu0 0.0
  %177 = vmatprep.subr.mxu0 0.0
  %178 = vmatpush1.msra.mxu0 0.0
  %179 = vmatprep.subr.mxu0 0.0
  %180 = vmatpush1.msra.mxu0 0.0
  %181 = vmatprep.subr.mxu0 0.0
  %182 = vmatpush1.msra.mxu0 0.0
  %183 = vmatprep.subr.mxu0 0.0
  %184 = vmatpush1.msra.mxu0 0.0
  %185 = vmatprep.subr.mxu0 0.0
  %186 = vmatpush1.msra.mxu0 0.0
  %187 = vmatprep.subr.mxu0 0.0
  %188 = vmatpush1.msra.mxu0 0.0
  %189 = vmatprep.subr.mxu0 0.0
  %190 = vmatpush1.msra.mxu0 0.0
  %191 = vmatprep.mubr.f32.mxu0 0.0
  %192 = vmatmul.mubr.f32.gmra.mrb[0].mxu0 %v121
  %v193 = vpop.f32.mrb[0].mxu0
  %v194 = vadd.f32 %v117, %v193
  %v195 = vpop.f32.mrb[0].mxu0
  %196 = vdwg.mxu0
  %v197 = vsub.f32 0.0, %v194
  %v198 = vmul.f32 %v197, 1.442695
  %v199 = vpow.pop %v198
  %v200 = vadd.f32 %v199, 1.0
  %v201 = vrcp.pop %v200
  %v202 = vmul.f32 1.0, %v201
  %vm203 = vcmask 517120
  %204 = vst.msk [vmem:[%s5] sm:$0x3] %vm203, %v202
  // Predicated region
  $region22: #{ffcse_forward.7} parent=0 // pred_check
    _
  $region23: #{ffcse_forward.7} parent=0 // pred_check_branch
    %206 = sbr.rel (0) target = $region25
  $region24: #{ffcse_forward.7} parent=0 // pred_region
    _
  $region25: #{ffcse_forward.7} parent=0 // pred_fallthru
    _
  // Predicated region
  $region26: #{ffcse_forward.7} parent=0 // pred_check
    _
  $region27: #{ffcse_forward.7} parent=0 // pred_check_branch
    %208 = sbr.rel (0) target = $region29
  $region28: #{ffcse_forward.7} parent=0 // pred_region
    _
  $region29: #{ffcse_forward.7} parent=0 // pred_fallthru
    _

// kernel: ffcse_forward.9
$region0: #{ffcse_forward.9}
  #allocation0 [shape = 'u32[]', space=smem, size = 0x4, offset = 0x4, fixed_abs, tag = 'smem constant byte address 0x4 - core index']
  #allocation1 [shape = 'u32[144,128]{1,0:T(1,128)}', space=vmem, size = 0x12000, scoped, tag = 'internal scratch']
  %s0 = inlined_call_operand.vmem [shape: f32[64,256], index: 0, kind: input, shape index: {}]
  %s1 = inlined_call_operand.vmem [shape: f32[64,1], index: 1, kind: input, shape index: {}]
  %s2 = inlined_call_operand.vmem [shape: f32[64,256], index: 2, kind: output, shape index: {}]
  %s3 = sld [smem:[#allocation0]]
  $region41: #{ffcse_forward.9} parent=0
    _
  %s5 = ssub.s32 1, %s3
  %s6 = scalar_select 0, %s5, %s3
  loop: start=0, step=1, limit=4
  $region2: #{ffcse_forward.9} parent=0 // loop_pre_header
    _
  $region3: #{ffcse_forward.9} parent=0 // loop_header
    %s8 = sphi 0, %s12
    %p9 = scmp.ge.s32.totalorder %s8, 4
    %s18 = sphi 0, %s20
    %s21 = sphi 0, %s18
    %s22 = sphi 0, %s21
    %s38 = sphi 0, %s22
    %s44 = sphi 0, %s46
    %s47 = sphi 0, %s44
    %s48 = sphi 0, %s47
    %s64 = sphi 0, %s48
    %s70 = sphi 0, %s72
    %s73 = sphi 0, %s70
    %s74 = sphi 0, %s73
    %s90 = sphi 0, %s74
  $region4: #{ffcse_forward.9} parent=0 // loop_header_branch
    %11 = sbr.rel (%p9) target = $region8
  $region5: #{ffcse_forward.9} parent=0 // loop_body
    %s13 = ssub.s32 %s8, 1
    %s14 = ssub.s32 %s8, 2
    %s15 = sadd.s32 %s8, 1
    %s16 = ssub.s32 %s8, %s15
    %p17 = scmp.eq.s32.totalorder %s16, 0
    %s19 = sadd.s32 %s18, 1
    %s20 = scalar_select %p17, %s18, %s19
    %p23 = pneg %p17
    %p24 = scmp.eq.s32.totalorder %s8, 1
    %p25 = por %p23, %p24
    %p26 = scmp.ne.s32.totalorder %s18, %s21
    %p27 = scmp.eq.s32.totalorder %s8, 0
    %p28 = por %p26, %p27
    %p29 = scmp.ne.s32.totalorder %s18, %s21
    %p30 = scmp.eq.s32.totalorder %s13, 1
    %p31 = por %p29, %p30
    %p32 = scmp.ne.s32.totalorder %s21, %s22
    %p33 = scmp.eq.s32.totalorder %s13, 0
    %p34 = por %p32, %p33
    %p35 = scmp.ne.s32.totalorder %s21, %s22
    %p36 = scmp.eq.s32.totalorder %s14, 1
    %p37 = por %p35, %p36
    %p39 = scmp.ne.s32.totalorder %s22, %s38
    %p40 = scmp.eq.s32.totalorder %s14, 0
    %p41 = por %p39, %p40
    %s42 = ssub.s32 %s8, %s15
    %p43 = scmp.eq.s32.totalorder %s42, 0
    %s45 = sadd.s32 %s44, 1
    %s46 = scalar_select %p43, %s44, %s45
    %p49 = pneg %p43
    %p50 = scmp.eq.s32.totalorder %s8, 1
    %p51 = por %p49, %p50
    %p52 = scmp.ne.s32.totalorder %s44, %s47
    %p53 = scmp.eq.s32.totalorder %s8, 0
    %p54 = por %p52, %p53
    %p55 = scmp.ne.s32.totalorder %s44, %s47
    %p56 = scmp.eq.s32.totalorder %s13, 1
    %p57 = por %p55, %p56
    %p58 = scmp.ne.s32.totalorder %s47, %s48
    %p59 = scmp.eq.s32.totalorder %s13, 0
    %p60 = por %p58, %p59
    %p61 = scmp.ne.s32.totalorder %s47, %s48
    %p62 = scmp.eq.s32.totalorder %s14, 1
    %p63 = por %p61, %p62
    %p65 = scmp.ne.s32.totalorder %s48, %s64
    %p66 = scmp.eq.s32.totalorder %s14, 0
    %p67 = por %p65, %p66
    %s68 = ssub.s32 %s8, %s15
    %p69 = scmp.eq.s32.totalorder %s68, 0
    %s71 = sadd.s32 %s70, 1
    %s72 = scalar_select %p69, %s70, %s71
    %p75 = pneg %p69
    %p76 = scmp.eq.s32.totalorder %s8, 1
    %p77 = por %p75, %p76
    %p78 = scmp.ne.s32.totalorder %s70, %s73
    %p79 = scmp.eq.s32.totalorder %s8, 0
    %p80 = por %p78, %p79
    %p81 = scmp.ne.s32.totalorder %s70, %s73
    %p82 = scmp.eq.s32.totalorder %s13, 1
    %p83 = por %p81, %p82
    %p84 = scmp.ne.s32.totalorder %s73, %s74
    %p85 = scmp.eq.s32.totalorder %s13, 0
    %p86 = por %p84, %p85
    %p87 = scmp.ne.s32.totalorder %s73, %s74
    %p88 = scmp.eq.s32.totalorder %s14, 1
    %p89 = por %p87, %p88
    %p91 = scmp.ne.s32.totalorder %s74, %s90
    %p92 = scmp.eq.s32.totalorder %s14, 0
    %p93 = por %p91, %p92
    %p94 = scmp.le.s32.totalorder 1, %s8
    %p95 = scmp.lt.s32.totalorder %s8, 3
    %p96 = pnand %p94, %p95
    %p97 = pneg %p96
    // Predicated region
    $region9: #{ffcse_forward.9} parent=5 // pred_check
      _
    $region10: #{ffcse_forward.9} parent=5 // pred_check_branch
      %99 = sbr.rel (%p96) target = $region12
    $region11: #{ffcse_forward.9} parent=5 // pred_region
      %s100 = ssub.s32 %s8, 1
    $region12: #{ffcse_forward.9} parent=5 // pred_fallthru
      _
    %p101 = scmp.lt.s32.totalorder %s8, 2
    // Predicated region
    $region13: #{ffcse_forward.9} parent=5 // pred_check
      %p102 = pneg %p101
    $region14: #{ffcse_forward.9} parent=5 // pred_check_branch
      %104 = sbr.rel (%p102) target = $region16
    $region15: #{ffcse_forward.9} parent=5 // pred_region
      // Predicated region
      $region17: #{ffcse_forward.9} parent=15 // pred_check
        %p105 = pneg %p28
      $region18: #{ffcse_forward.9} parent=15 // pred_check_branch
        %107 = sbr.rel (%p105) target = $region20
      $region19: #{ffcse_forward.9} parent=15 // pred_region
        %s108 = smul.u32 4, %s8
        %p109 = scmp.lt.s32.totalorder %s108, 7
        %s110 = scalar_select %p109, %s108, 7
        %s111 = smul.addr %s110, 2
        %s112 = smul.addr %s111, 8
        %s113 = scalar_lea.vmem %s0, %s112
        %s114 = smul.u32 4, %s8
      $region20: #{ffcse_forward.9} parent=15 // pred_fallthru
        _
      // Predicated region
      $region21: #{ffcse_forward.9} parent=15 // pred_check
        %p115 = pneg %p54
      $region22: #{ffcse_forward.9} parent=15 // pred_check_branch
        %117 = sbr.rel (%p115) target = $region24
      $region23: #{ffcse_forward.9} parent=15 // pred_region
        %s118 = smul.u32 4, %s8
        %p119 = scmp.lt.s32.totalorder %s118, 7
        %s120 = scalar_select %p119, %s118, 7
        %s121 = smul.addr %s120, 8
        %s122 = scalar_lea.vmem %s1, %s121
        %s123 = smul.u32 4, %s8
      $region24: #{ffcse_forward.9} parent=15 // pred_fallthru
        _
    $region16: #{ffcse_forward.9} parent=5 // pred_fallthru
      _
    %p124 = scmp.le.s32.totalorder 1, %s8
    %p125 = scmp.lt.s32.totalorder %s8, 3
    %p126 = pnand %p124, %p125
    %p127 = pneg %p126
    // Predicated region
    $region25: #{ffcse_forward.9} parent=5 // pred_check
      _
    $region26: #{ffcse_forward.9} parent=5 // pred_check_branch
      %129 = sbr.rel (%p126) target = $region28
    $region27: #{ffcse_forward.9} parent=5 // pred_region
      %s130 = ssub.s32 %s8, 1
      %s131 = smul.u32 4, %s13
      %p132 = scmp.lt.s32.totalorder %s131, 7
      %s133 = scalar_select %p132, %s131, 7
      %s134 = smul.addr %s133, 2
      %s135 = smul.addr %s134, 8
      %s136 = scalar_lea.vmem %s0, %s135
      %p137 = pneg %p34
      %p138 = pneg %p31
      %s139 = smul.u32 4, %s13
      %p140 = scmp.lt.s32.totalorder %s139, 7
      %s141 = scalar_select %p140, %s139, 7
      %s142 = smul.addr %s141, 8
      %s143 = scalar_lea.vmem %s1, %s142
      %p144 = pneg %p60
      %p145 = pneg %p57
      %p146 = pneg %p86
      %p147 = pneg %p83
      %s148 = smul.u32 4, %s13
      %p149 = scmp.lt.s32.totalorder %s148, 7
      %s150 = scalar_select %p149, %s148, 7
      %s151 = smul.addr %s150, 2
      %s152 = smul.addr %s151, 8
      %s153 = scalar_lea.vmem %s2, %s152
      %s154 = smul.u32 4, %s13
      %p155 = scmp.lt.s32.totalorder %s154, 7
      %s156 = scalar_select %p155, %s154, 7
      %s157 = smul.addr %s156, 2
      %s158 = smul.addr %s157, 8
      %s159 = scalar_lea.vmem %s0, %s158
      %s160 = smul.u32 4, %s13
      %s161 = smul.u32 4, %s13
      %p162 = scmp.lt.s32.totalorder %s161, 7
      %s163 = scalar_select %p162, %s161, 7
      %s164 = smul.addr %s163, 8
      %s165 = scalar_lea.vmem %s1, %s164
      %s166 = smul.u32 4, %s13
      %s167 = smul.u32 4, %s13
      %p168 = scmp.lt.s32.totalorder %s167, 7
      %s169 = scalar_select %p168, %s167, 7
      %s170 = smul.addr %s169, 2
      %s171 = smul.addr %s170, 8
      %s172 = scalar_lea.vmem %s2, %s171
      %s173 = smul.u32 4, %s13
      %v174 = vld [vmem:[%s159] sm:$0xff]
      %v175 = vld [vmem:[%s159 + $0x8] sm:$0xff]
      %v176 = vld [vmem:[%s159 + $0x10] sm:$0xff]
      %v177 = vld [vmem:[%s159 + $0x18] sm:$0xff]
      %v178 = vld [vmem:[%s159 + $0x20] sm:$0xff]
      %v179 = vld [vmem:[%s159 + $0x28] sm:$0xff]
      %v180 = vld [vmem:[%s159 + $0x30] sm:$0xff]
      %v181 = vld [vmem:[%s159 + $0x38] sm:$0xff]
      %v182 = vld [vmem:[%s165] sm:$0xff]
      %v183 = vld [vmem:[%s165 + $0x8] sm:$0xff]
      %v184 = vld [vmem:[%s165 + $0x10] sm:$0xff]
      %v185 = vld [vmem:[%s165 + $0x18] sm:$0xff]
      %187 = vset.pattern.permute.xlu0 0
      %188 = vperm.xlu0 %187, %v182
      %v189 = vpop.permute.xlu0 %188
      %192 = vset.pattern.permute.xlu0 0
      %193 = vperm.xlu0 %192, %v183
      %v194 = vpop.permute.xlu0 %193
      %197 = vset.pattern.permute.xlu0 0
      %198 = vperm.xlu0 %197, %v184
      %v199 = vpop.permute.xlu0 %198
      %202 = vset.pattern.permute.xlu0 0
      %203 = vperm.xlu0 %202, %v185
      %v204 = vpop.permute.xlu0 %203
      %v206 = vmul.f32 %v174, %v189
      %v207 = vmul.f32 %v175, %v189
      %v208 = vmul.f32 %v176, %v194
      %v209 = vmul.f32 %v177, %v194
      %v210 = vmul.f32 %v178, %v199
      %v211 = vmul.f32 %v179, %v199
      %v212 = vmul.f32 %v180, %v204
      %v213 = vmul.f32 %v181, %v204
      %214 = vst [vmem:[%s172] sm:$0xff] %v206
      %215 = vst [vmem:[%s172 + $0x8] sm:$0xff] %v207
      %216 = vst [vmem:[%s172 + $0x10] sm:$0xff] %v208
      %217 = vst [vmem:[%s172 + $0x18] sm:$0xff] %v209
      %218 = vst [vmem:[%s172 + $0x20] sm:$0xff] %v210
      %219 = vst [vmem:[%s172 + $0x28] sm:$0xff] %v211
      %220 = vst [vmem:[%s172 + $0x30] sm:$0xff] %v212
      %221 = vst [vmem:[%s172 + $0x38] sm:$0xff] %v213
      %s222 = smul.u32 4, %s13
      %p223 = scmp.lt.s32.totalorder %s222, 7
      %s224 = scalar_select %p223, %s222, 7
      %s225 = smul.addr %s224, 2
      %s226 = smul.addr %s225, 8
      %s227 = scalar_lea.vmem %s2, %s226
      // Predicated region
      $region29: #{ffcse_forward.9} parent=27 // pred_check
        %p228 = pneg %p83
      $region30: #{ffcse_forward.9} parent=27 // pred_check_branch
        %230 = sbr.rel (%p228) target = $region32
      $region31: #{ffcse_forward.9} parent=27 // pred_region
        %s231 = smul.u32 4, %s13
      $region32: #{ffcse_forward.9} parent=27 // pred_fallthru
        _
    $region28: #{ffcse_forward.9} parent=5 // pred_fallthru
      _
    %p232 = scmp.le.s32.totalorder 2, %s8
    // Predicated region
    $region33: #{ffcse_forward.9} parent=5 // pred_check
      %p233 = pneg %p232
    $region34: #{ffcse_forward.9} parent=5 // pred_check_branch
      %235 = sbr.rel (%p233) target = $region36
    $region35: #{ffcse_forward.9} parent=5 // pred_region
      %s236 = ssub.s32 %s8, 2
      // Predicated region
      $region37: #{ffcse_forward.9} parent=35 // pred_check
        %p237 = pneg %p89
      $region38: #{ffcse_forward.9} parent=35 // pred_check_branch
        %239 = sbr.rel (%p237) target = $region40
      $region39: #{ffcse_forward.9} parent=35 // pred_region
        %s240 = smul.u32 4, %s14
        %p241 = scmp.lt.s32.totalorder %s240, 7
        %s242 = scalar_select %p241, %s240, 7
        %s243 = smul.addr %s242, 2
        %s244 = smul.addr %s243, 8
        %s245 = scalar_lea.vmem %s2, %s244
      $region40: #{ffcse_forward.9} parent=35 // pred_fallthru
        _
    $region36: #{ffcse_forward.9} parent=5 // pred_fallthru
      _
  $region6: #{ffcse_forward.9} parent=0 // loop_footer
    %s12 = sadd.s32 1, %s8
  $region7: #{ffcse_forward.9} parent=0 // loop_footer_branch
    %7 = sbr.rel target = $region3
  $region8: #{ffcse_forward.9} parent=0 // loop_exit
    _

</llo_original>
